<compile_context>
chip_gen: v7x
topology: tpu7x:2x2x1
jax: 0.10.0
libtpu: 0.0.40
codegen_flags: <defaults>
</compile_context>

<pallas_src>
import jax
import jax.numpy as jnp
from jax.experimental import pallas as pl
from jax.experimental.pallas import tpu as pltpu


# ----------------------------- kernels ------------------------------------- #

def _se_fused_kernel(x_ref, w1_ref, w2_ref, bnb_ref, o_ref):
    # x block: (nb, C, HW), native dtype; weights f32 (1/HW and BN folded in).
    x = x_ref[...]
    pooled = jnp.sum(x, axis=2, dtype=jnp.float32)                    # (nb, C)
    hidden = jnp.dot(pooled, w1_ref[...], preferred_element_type=jnp.float32)
    hidden = jnp.maximum(hidden + bnb_ref[...], 0.0)                  # (nb, Cr)
    atten = jnp.dot(hidden, w2_ref[...], preferred_element_type=jnp.float32)
    atten = jnp.clip(atten + 3.0, 0.0, 6.0) * (1.0 / 6.0)             # (nb, C) f32
    # multiply in f32 (promotion), single cast on store
    o_ref[...] = (x * atten[:, :, None]).astype(o_ref.dtype)


def _se_attention_kernel(x_ref, w1_ref, w2_ref, bnb_ref, a_ref):
    # x block: (1, C, HW); a block: (1, C, 1) f32
    pooled = jnp.sum(x_ref[...], axis=2, dtype=jnp.float32)           # (1, C)
    hidden = jnp.dot(pooled, w1_ref[...], preferred_element_type=jnp.float32)
    hidden = jnp.maximum(hidden + bnb_ref[...], 0.0)
    atten = jnp.dot(hidden, w2_ref[...], preferred_element_type=jnp.float32)
    atten = jnp.clip(atten + 3.0, 0.0, 6.0) * (1.0 / 6.0)
    a_ref[...] = atten[:, :, None]


def _se_scale_kernel(x_ref, a_ref, o_ref):
    # x: (1, Cb, HW) native dtype; a: (1, Cb, 1) f32 -> broadcast over lanes.
    o_ref[...] = (x_ref[...] * a_ref[...]).astype(o_ref.dtype)


# ----------------------------- helpers -------------------------------------- #

def _vmem_capacity_bytes():
    try:
        return int(pltpu.get_tpu_info().vmem_capacity_bytes)
    except Exception:
        return 128 << 20   # v5e/v6e-class default


def _padded_bytes(shape, dtype):
    """VMEM bytes of a tile: last dim padded to 128 lanes, 2nd-last to the
    sublane pack multiple of this dtype (8 for f32, 16 for bf16, 32 for i8)."""
    itemsize = jnp.dtype(dtype).itemsize
    sub = max(8, 32 // itemsize)
    dims = list(shape)
    dims[-1] = -(-dims[-1] // 128) * 128
    if len(dims) >= 2:
        dims[-2] = -(-dims[-2] // sub) * sub
    total = 1
    for d in dims:
        total *= d
    return total * itemsize


def _pick_channel_tile(C, N, dtype, HW, budget):
    """Channel tile for the scale kernel: multiple of the sublane pack, divides
    C, >= 2 tiles; prefer the largest tile that still yields >= 4 grid steps."""
    sub = max(8, 32 // jnp.dtype(dtype).itemsize)
    best_any = None
    best_steps = None
    for cand in range(sub, C, sub):
        if C % cand:
            continue
        if 4 * _padded_bytes((cand, HW), dtype) > budget:   # in+out, double-buffered
            continue
        best_any = cand
        if N * (C // cand) >= 4:
            best_steps = cand
    return best_steps if best_steps is not None else best_any


# ----------------------------- wrapper -------------------------------------- #

def se_layer(x_nchw, w1, w2, bn_gamma, bn_beta, bn_mean, bn_var, eps=1e-5,
             block_budget_bytes=None, force_split=None):
    N, C, H, W = x_nchw.shape
    Cr = C // 4
    HW = H * W
    dtype = x_nchw.dtype
    itemsize = jnp.dtype(dtype).itemsize

    # ---- fold eval-mode BN and the 1/HW of the average pool into conv1 ----
    inv_std = 1.0 / jnp.sqrt(bn_var.astype(jnp.float32) + eps)
    bn_scale = bn_gamma.astype(jnp.float32) * inv_std                         # (Cr,)
    bn_bias = bn_beta.astype(jnp.float32) - bn_mean.astype(jnp.float32) * bn_scale
    w1_t = (w1.reshape(Cr, C).astype(jnp.float32).T * bn_scale[None, :]) * (1.0 / HW)
    w2_t = w2.reshape(C, Cr).astype(jnp.float32).T                            # (Cr, C)
    bnb = bn_bias.reshape(1, Cr)

    # Free view: channels-first, HW dense on lanes; no HBM repack in or out.
    x_in = x_nchw.reshape(N, C, HW)

    # ---- padding-aware VMEM accounting ----
    per_sample = _padded_bytes((C, HW), dtype)            # one (C, HW) slab in VMEM
    weight_vmem = 2 * (_padded_bytes((C, Cr), jnp.float32)
                       + _padded_bytes((Cr, C), jnp.float32)
                       + _padded_bytes((1, Cr), jnp.float32))   # double-buffered inputs
    # TODO(synk): pipeline_mode=pl.Buffered(1) on the weight specs would halve weight_vmem.

    vmem_cap = _vmem_capacity_bytes()
    small_vmem = vmem_cap <= (96 << 20)    # v7x-class part: 64 MiB VMEM, 2 TensorCores
    if block_budget_bytes is None:
        block_budget_bytes = (14 << 20) if small_vmem else (40 << 20)
    vmem_ceiling = max(vmem_cap - (12 << 20), 16 << 20)   # leave headroom for Mosaic scratch

    weight_hbm_bytes = (w1_t.size + w2_t.size + bnb.size) * 4
    x_bytes = N * C * HW * itemsize
    mlp_flops = 2 * N * C * Cr * 2

    # ---- optional two-kernel split (tiny batches on 2-core parts, or forced) ----
    fits_one_sample = 4 * per_sample + weight_vmem + (2 << 20) <= vmem_ceiling
    use_split = force_split
    if use_split is None:
        use_split = small_vmem and N < 4 and fits_one_sample
    cb = None
    if use_split:
        cb = _pick_channel_tile(C, N, dtype, HW, block_budget_bytes)
        if cb is None or not fits_one_sample:
            use_split = False

    if use_split:
        # Kernel 1: per-sample attention vector (reads x once, writes N*C*4 bytes).
        att_footprint = 2 * per_sample + weight_vmem + (1 << 20)
        att_vmem = int(min(max(att_footprint, 8 << 20), vmem_ceiling))
        atten = pl.pallas_call(
            _se_attention_kernel,
            out_shape=jax.ShapeDtypeStruct((N, C, 1), jnp.float32),
            grid=(N,),
            in_specs=[
                pl.BlockSpec((1, C, HW), lambda n: (n, 0, 0)),
                pl.BlockSpec((C, Cr), lambda n: (0, 0)),
                pl.BlockSpec((Cr, C), lambda n: (0, 0)),
                pl.BlockSpec((1, Cr), lambda n: (0, 0)),
            ],
            out_specs=pl.BlockSpec((1, C, 1), lambda n: (n, 0, 0)),
            compiler_params=pltpu.CompilerParams(
                dimension_semantics=("parallel",),
                vmem_limit_bytes=att_vmem,
            ),
            cost_estimate=pl.CostEstimate(
                flops=N * C * HW + mlp_flops,
                transcendentals=0,
                bytes_accessed=x_bytes + weight_hbm_bytes + N * C * 4),
        )(x_in, w1_t, w2_t, bnb)

        # Kernel 2: channel-tiled scale; grid (N, C//cb), fully parallel so both
        # TensorCores run even for batch-1.
        blk_bytes = 4 * _padded_bytes((cb, HW), dtype) + 2 * _padded_bytes((cb, 1), jnp.float32)
        scale_vmem = int(min(max(blk_bytes + (4 << 20), 8 << 20), vmem_ceiling))
        out = pl.pallas_call(
            _se_scale_kernel,
            out_shape=jax.ShapeDtypeStruct((N, C, HW), dtype),
            grid=(N, C // cb),
            in_specs=[
                pl.BlockSpec((1, cb, HW), lambda n, c: (n, c, 0)),
                pl.BlockSpec((1, cb, 1), lambda n, c: (n, c, 0)),
            ],
            out_specs=pl.BlockSpec((1, cb, HW), lambda n, c: (n, c, 0)),
            compiler_params=pltpu.CompilerParams(
                dimension_semantics=("parallel", "parallel"),
                vmem_limit_bytes=scale_vmem,
            ),
            cost_estimate=pl.CostEstimate(
                flops=N * C * HW,
                transcendentals=0,
                bytes_accessed=2 * x_bytes + N * C * 4),
        )(x_in, atten)
        return out.reshape(N, C, H, W)

    # ---- fused single-kernel path (default) ----
    # TODO(synk): for SE slabs larger than VMEM, tile the pool over channel
    # blocks as well (pool kernel + tiny MLP + scale kernel).

    # Batch block: largest divisor of N within the budget, but keep >= 4 grid
    # steps (>= 8 when N permits) so the pipeline / megacore have work.
    if N >= 8:
        max_nb = N // 8
    elif N >= 4:
        max_nb = N // 4
    else:
        max_nb = 1
    nb = 1
    for cand in range(1, max_nb + 1):
        if N % cand == 0 and 4 * cand * per_sample + weight_vmem <= block_budget_bytes:
            nb = cand

    footprint = 4 * nb * per_sample + weight_vmem
    vmem_limit = int(min(max(footprint + (4 << 20), 8 << 20), vmem_ceiling))

    out = pl.pallas_call(
        _se_fused_kernel,
        out_shape=jax.ShapeDtypeStruct((N, C, HW), dtype),
        grid=(N // nb,),
        in_specs=[
            pl.BlockSpec((nb, C, HW), lambda n: (n, 0, 0)),
            pl.BlockSpec((C, Cr), lambda n: (0, 0)),
            pl.BlockSpec((Cr, C), lambda n: (0, 0)),
            pl.BlockSpec((1, Cr), lambda n: (0, 0)),
        ],
        out_specs=pl.BlockSpec((nb, C, HW), lambda n: (n, 0, 0)),
        compiler_params=pltpu.CompilerParams(
            dimension_semantics=("parallel",),
            vmem_limit_bytes=vmem_limit,
        ),
        cost_estimate=pl.CostEstimate(
            flops=mlp_flops + 2 * N * C * HW,
            transcendentals=0,
            bytes_accessed=2 * x_bytes + weight_hbm_bytes),
    )(x_in, w1_t, w2_t, bnb)

    return out.reshape(N, C, H, W)


# ----------------------------- reference & test ----------------------------- #

def se_layer_ref(x, w1, w2, bn_gamma, bn_beta, bn_mean, bn_var, eps=1e-5):
    # Pure-JAX reference (same math as the PyTorch module in eval mode).
    N, C, H, W = x.shape
    Cr = C // 4
    pooled = jnp.mean(x.astype(jnp.float32), axis=(2, 3))            # (N, C)
    h = pooled @ w1.reshape(Cr, C).T                                  # (N, Cr)
    h = (h - bn_mean) / jnp.sqrt(bn_var + eps) * bn_gamma + bn_beta
    h = jnp.maximum(h, 0.0)
    atten = h @ w2.reshape(C, Cr).T                                   # (N, C)
    atten = jnp.clip(atten + 3.0, 0.0, 6.0) / 6.0
    return (x * atten[:, :, None, None]).astype(x.dtype)


def _run_case(key, N, C, H, W, force_split=None):
    Cr = C // 4
    k_x, k_w1, k_w2, k_g, k_b, k_m, k_v = jax.random.split(key, 7)
    x = jax.random.normal(k_x, (N, C, H, W), dtype=jnp.float32)
    w1 = jax.random.normal(k_w1, (Cr, C, 1, 1), dtype=jnp.float32) * 0.2
    w2 = jax.random.normal(k_w2, (C, Cr, 1, 1), dtype=jnp.float32) * 0.2
    bn_gamma = 1.0 + 0.1 * jax.random.normal(k_g, (Cr,), dtype=jnp.float32)
    bn_beta = 0.1 * jax.random.normal(k_b, (Cr,), dtype=jnp.float32)
    bn_mean = 0.1 * jax.random.normal(k_m, (Cr,), dtype=jnp.float32)
    bn_var = 1.0 + 0.1 * jax.random.uniform(k_v, (Cr,), dtype=jnp.float32)

    ref = se_layer_ref(x, w1, w2, bn_gamma, bn_beta, bn_mean, bn_var)
    out = se_layer(x, w1, w2, bn_gamma, bn_beta, bn_mean, bn_var,
                   force_split=force_split)
    out = jax.block_until_ready(out)

    assert out.shape == ref.shape and out.dtype == ref.dtype
    assert jnp.allclose(out, ref, atol=1e-5, rtol=1e-5)


if __name__ == "__main__":
    key = jax.random.PRNGKey(0)
    k1, k2, k3 = jax.random.split(key, 3)

    # fused path, HW already lane-aligned (HW = 256)
    _run_case(k1, N=2, C=16, H=16, W=16)
    # fused path, ragged HW (lane padding only, no repack), nb > 1 / >= 8 steps
    _run_case(k2, N=16, C=32, H=7, W=7)
    # two-kernel split path (forced here; auto-selected on v7x-class parts for tiny N)
    _run_case(k3, N=2, C=128, H=7, W=7, force_split=True)

    print("KERNEL_OK")
</pallas_src>

<mosaic_0001>
module attributes {stable_mosaic.version = 11 : i64} {
  func.func @_se_fused_kernel(%arg0: i32, %arg1: memref<1x16x256xf32, #tpu.memory_space<vmem>>, %arg2: memref<16x4xf32, #tpu.memory_space<vmem>>, %arg3: memref<4x16xf32, #tpu.memory_space<vmem>>, %arg4: memref<1x4xf32, #tpu.memory_space<vmem>>, %arg5: memref<1x16x256xf32, #tpu.memory_space<vmem>>) attributes {dimension_semantics = [#tpu.dimension_semantics<parallel>], iteration_bounds = array<i64: 2>, scalar_prefetch = 0 : i64, scratch_operands = 0 : i64, tpu.core_type = #tpu.core_type<tc>, window_params = [{transform_indices = @transform_0, window_bounds = array<i64: 1, 16, 256>}, {pipeline_mode = #tpu.pipeline_mode<synchronous>, transform_indices = @transform_1, window_bounds = array<i64: 16, 4>}, {pipeline_mode = #tpu.pipeline_mode<synchronous>, transform_indices = @transform_2, window_bounds = array<i64: 4, 16>}, {pipeline_mode = #tpu.pipeline_mode<synchronous>, transform_indices = @transform_3, window_bounds = array<i64: 1, 4>}, {transform_indices = @transform_4, window_bounds = array<i64: 1, 16, 256>}]} {
    %c0 = arith.constant 0 : index
    %c0_0 = arith.constant 0 : index
    %c0_1 = arith.constant 0 : index
    %0 = vector.load %arg1[%c0, %c0_0, %c0_1] : memref<1x16x256xf32, #tpu.memory_space<vmem>>, vector<1x16x256xf32>
    %cst = arith.constant dense<0.000000e+00> : vector<1x16xf32>
    %1 = vector.multi_reduction <add>, %0, %cst [2] : vector<1x16x256xf32> to vector<1x16xf32>
    %c0_2 = arith.constant 0 : index
    %c0_3 = arith.constant 0 : index
    %2 = vector.load %arg2[%c0_2, %c0_3] : memref<16x4xf32, #tpu.memory_space<vmem>>, vector<16x4xf32>
    %cst_4 = arith.constant dense<0.000000e+00> : vector<1x4xf32>
    %3 = tpu.matmul %1, %2, %cst_4 {dimension_numbers = #tpu.dot_dimension_numbers<[1], [0], [0], [1], [0, 0, 1, 1], [], []>} : vector<1x16xf32>, vector<16x4xf32>, vector<1x4xf32> -> vector<1x4xf32>
    %c0_5 = arith.constant 0 : index
    %c0_6 = arith.constant 0 : index
    %4 = vector.load %arg4[%c0_5, %c0_6] : memref<1x4xf32, #tpu.memory_space<vmem>>, vector<1x4xf32>
    %5 = arith.addf %3, %4 : vector<1x4xf32>
    %cst_7 = arith.constant 0.000000e+00 : f32
    %6 = vector.broadcast %cst_7 : f32 to vector<1x4xf32>
    %7 = arith.maximumf %5, %6 : vector<1x4xf32>
    %c0_8 = arith.constant 0 : index
    %c0_9 = arith.constant 0 : index
    %8 = vector.load %arg3[%c0_8, %c0_9] : memref<4x16xf32, #tpu.memory_space<vmem>>, vector<4x16xf32>
    %cst_10 = arith.constant dense<0.000000e+00> : vector<1x16xf32>
    %9 = tpu.matmul %7, %8, %cst_10 {dimension_numbers = #tpu.dot_dimension_numbers<[1], [0], [0], [1], [0, 0, 1, 1], [], []>} : vector<1x4xf32>, vector<4x16xf32>, vector<1x16xf32> -> vector<1x16xf32>
    %cst_11 = arith.constant 3.000000e+00 : f32
    %10 = vector.broadcast %cst_11 : f32 to vector<1x16xf32>
    %11 = arith.addf %9, %10 : vector<1x16xf32>
    %cst_12 = arith.constant 0.000000e+00 : f32
    %cst_13 = arith.constant 6.000000e+00 : f32
    %12 = vector.broadcast %cst_12 : f32 to vector<1x16xf32>
    %13 = arith.maximumf %12, %11 : vector<1x16xf32>
    %14 = vector.broadcast %cst_13 : f32 to vector<1x16xf32>
    %15 = arith.minimumf %14, %13 : vector<1x16xf32>
    %cst_14 = arith.constant 0.166666672 : f32
    %16 = vector.broadcast %cst_14 : f32 to vector<1x16xf32>
    %17 = arith.mulf %15, %16 : vector<1x16xf32>
    %18 = vector.shape_cast %17 : vector<1x16xf32> to vector<1x16x1xf32>
    %19 = vector.broadcast %18 : vector<1x16x1xf32> to vector<1x16x256xf32>
    %20 = arith.mulf %0, %19 : vector<1x16x256xf32>
    %c0_15 = arith.constant 0 : index
    %c0_16 = arith.constant 0 : index
    %c0_17 = arith.constant 0 : index
    %21 = vector.load %arg5[%c0_15, %c0_16, %c0_17] : memref<1x16x256xf32, #tpu.memory_space<vmem>>, vector<1x16x256xf32>
    tpu.vector_store %arg5[%c0_15, %c0_16, %c0_17], %20 {strides = array<i32>} : memref<1x16x256xf32, #tpu.memory_space<vmem>>, vector<1x16x256xf32>,
    return
  }
  func.func @transform_0(%arg0: i32) -> (i32, i32, i32) {
    %c0_i32 = arith.constant 0 : i32
    %c0_i32_0 = arith.constant 0 : i32
    %c0_i32_1 = arith.constant 0 : i32
    return %arg0, %c0_i32, %c0_i32_0 : i32, i32, i32
  }
  func.func @transform_1(%arg0: i32) -> (i32, i32) {
    %c0_i32 = arith.constant 0 : i32
    %c0_i32_0 = arith.constant 0 : i32
    %c0_i32_1 = arith.constant 0 : i32
    return %c0_i32, %c0_i32_0 : i32, i32
  }
  func.func @transform_2(%arg0: i32) -> (i32, i32) {
    %c0_i32 = arith.constant 0 : i32
    %c0_i32_0 = arith.constant 0 : i32
    %c0_i32_1 = arith.constant 0 : i32
    return %c0_i32, %c0_i32_0 : i32, i32
  }
  func.func @transform_3(%arg0: i32) -> (i32, i32) {
    %c0_i32 = arith.constant 0 : i32
    %c0_i32_0 = arith.constant 0 : i32
    %c0_i32_1 = arith.constant 0 : i32
    return %c0_i32, %c0_i32_0 : i32, i32
  }
  func.func @transform_4(%arg0: i32) -> (i32, i32, i32) {
    %c0_i32 = arith.constant 0 : i32
    %c0_i32_0 = arith.constant 0 : i32
    %c0_i32_1 = arith.constant 0 : i32
    return %arg0, %c0_i32, %c0_i32_0 : i32, i32, i32
  }
}

</mosaic_0001>

<llo_original>
// kernel: tpu_custom_call.1
$region0: #{tpu_custom_call.1}
  #allocation0 [shape = 'u32[]', space=smem, size = 0x4, offset = 0x4, fixed_abs, tag = 'smem constant byte address 0x4 - core index']
  #allocation1 [shape = 'u32[144,128]{1,0:T(1,128)}', space=vmem, size = 0x12000, scoped, tag = 'internal scratch']
  %s0 = inlined_call_operand.hbm [shape: f32[2,16,256], index: 0, kind: input, shape index: {}]
  %s1 = inlined_call_operand.vmem [shape: f32[16,4], index: 1, kind: input, shape index: {}]
  %s2 = inlined_call_operand.vmem [shape: f32[4,16], index: 2, kind: input, shape index: {}]
  %s3 = inlined_call_operand.vmem [shape: f32[1,4], index: 3, kind: input, shape index: {}]
  %s4 = inlined_call_operand.hbm [shape: f32[2,16,256], index: 4, kind: output, shape index: {}]
  %s5 = sld [smem:[#allocation0]]
  $region53: #{tpu_custom_call.1} parent=0
    _
  %s7 = ssub.s32 1, %s5
  %s8 = scalar_select 0, %s7, %s5
  $region1: #{tpu_custom_call.1} parent=0
    #allocation2 [shape = 'u8[32768]{0}', space=vmem, size = 0x8000, scoped, tag = 'input window, operand 0']
    #allocation3 [shape = 's32[2]{0}', space=sflag, size = 0x8, scoped, tag = 'scoped memory for tpu_custom_call.1']
    #allocation4 [shape = 's32[2]{0}', space=sflag, size = 0x8, scoped, tag = 'scoped memory for tpu_custom_call.1']
    #allocation5 [shape = 'u8[32768]{0}', space=vmem, size = 0x8000, scoped, tag = 'output window, operand 0']
    %9 = vsyncpa [#allocation3], 0
    %s10 = scalar_lea.sflag [#allocation3], 1
    %11 = vsyncpa %s10, 0
    %12 = vsyncpa [#allocation4], 0
    %s13 = scalar_lea.sflag [#allocation4], 1
    %14 = vsyncpa %s13, 0
    loop: start=0, step=1, limit=4
    $region2: #{tpu_custom_call.1} parent=1 // loop_pre_header
      _
    $region3: #{tpu_custom_call.1} parent=1 // loop_header
      %s16 = sphi 0, %s20
      %p17 = scmp.ge.s32.totalorder %s16, 4
      %s26 = sphi 0, %s28
      %s29 = sphi 0, %s26
      %s30 = sphi 0, %s29
      %s46 = sphi 0, %s30
      %s50 = sphi 0, %s50
      %s52 = sphi 0, %s50
      %s53 = sphi 0, %s52
      %s67 = sphi 0, %s53
      %s71 = sphi 0, %s71
      %s73 = sphi 0, %s71
      %s74 = sphi 0, %s73
      %s88 = sphi 0, %s74
      %s92 = sphi 0, %s92
      %s94 = sphi 0, %s92
      %s95 = sphi 0, %s94
      %s109 = sphi 0, %s95
      %s115 = sphi 0, %s117
      %s118 = sphi 0, %s115
      %s119 = sphi 0, %s118
      %s135 = sphi 0, %s119
    $region4: #{tpu_custom_call.1} parent=1 // loop_header_branch
      %19 = sbr.rel (%p17) target = $region8
    $region5: #{tpu_custom_call.1} parent=1 // loop_body
      %s21 = ssub.s32 %s16, 1
      %s22 = ssub.s32 %s16, 2
      %s23 = sadd.s32 %s16, 1
      %s24 = ssub.s32 %s16, %s23
      %p25 = scmp.eq.s32.totalorder %s24, 0
      %s27 = sadd.s32 %s26, 1
      %s28 = scalar_select %p25, %s26, %s27
      %p31 = pneg %p25
      %p32 = scmp.eq.s32.totalorder %s16, 1
      %p33 = por %p31, %p32
      %p34 = scmp.ne.s32.totalorder %s26, %s29
      %p35 = scmp.eq.s32.totalorder %s16, 0
      %p36 = por %p34, %p35
      %p37 = scmp.ne.s32.totalorder %s26, %s29
      %p38 = scmp.eq.s32.totalorder %s21, 1
      %p39 = por %p37, %p38
      %p40 = scmp.ne.s32.totalorder %s29, %s30
      %p41 = scmp.eq.s32.totalorder %s21, 0
      %p42 = por %p40, %p41
      %p43 = scmp.ne.s32.totalorder %s29, %s30
      %p44 = scmp.eq.s32.totalorder %s22, 1
      %p45 = por %p43, %p44
      %p47 = scmp.ne.s32.totalorder %s30, %s46
      %p48 = scmp.eq.s32.totalorder %s22, 0
      %p49 = por %p47, %p48
      %s51 = sadd.s32 %s50, 1
      %p54 = scmp.eq.s32.totalorder %s16, 1
      %p55 = scmp.ne.s32.totalorder %s50, %s52
      %p56 = scmp.eq.s32.totalorder %s16, 0
      %p57 = por %p55, %p56
      %p58 = scmp.ne.s32.totalorder %s50, %s52
      %p59 = scmp.eq.s32.totalorder %s21, 1
      %p60 = por %p58, %p59
      %p61 = scmp.ne.s32.totalorder %s52, %s53
      %p62 = scmp.eq.s32.totalorder %s21, 0
      %p63 = por %p61, %p62
      %p64 = scmp.ne.s32.totalorder %s52, %s53
      %p65 = scmp.eq.s32.totalorder %s22, 1
      %p66 = por %p64, %p65
      %p68 = scmp.ne.s32.totalorder %s53, %s67
      %p69 = scmp.eq.s32.totalorder %s22, 0
      %p70 = por %p68, %p69
      %s72 = sadd.s32 %s71, 1
      %p75 = scmp.eq.s32.totalorder %s16, 1
      %p76 = scmp.ne.s32.totalorder %s71, %s73
      %p77 = scmp.eq.s32.totalorder %s16, 0
      %p78 = por %p76, %p77
      %p79 = scmp.ne.s32.totalorder %s71, %s73
      %p80 = scmp.eq.s32.totalorder %s21, 1
      %p81 = por %p79, %p80
      %p82 = scmp.ne.s32.totalorder %s73, %s74
      %p83 = scmp.eq.s32.totalorder %s21, 0
      %p84 = por %p82, %p83
      %p85 = scmp.ne.s32.totalorder %s73, %s74
      %p86 = scmp.eq.s32.totalorder %s22, 1
      %p87 = por %p85, %p86
      %p89 = scmp.ne.s32.totalorder %s74, %s88
      %p90 = scmp.eq.s32.totalorder %s22, 0
      %p91 = por %p89, %p90
      %s93 = sadd.s32 %s92, 1
      %p96 = scmp.eq.s32.totalorder %s16, 1
      %p97 = scmp.ne.s32.totalorder %s92, %s94
      %p98 = scmp.eq.s32.totalorder %s16, 0
      %p99 = por %p97, %p98
      %p100 = scmp.ne.s32.totalorder %s92, %s94
      %p101 = scmp.eq.s32.totalorder %s21, 1
      %p102 = por %p100, %p101
      %p103 = scmp.ne.s32.totalorder %s94, %s95
      %p104 = scmp.eq.s32.totalorder %s21, 0
      %p105 = por %p103, %p104
      %p106 = scmp.ne.s32.totalorder %s94, %s95
      %p107 = scmp.eq.s32.totalorder %s22, 1
      %p108 = por %p106, %p107
      %p110 = scmp.ne.s32.totalorder %s95, %s109
      %p111 = scmp.eq.s32.totalorder %s22, 0
      %p112 = por %p110, %p111
      %s113 = ssub.s32 %s16, %s23
      %p114 = scmp.eq.s32.totalorder %s113, 0
      %s116 = sadd.s32 %s115, 1
      %s117 = scalar_select %p114, %s115, %s116
      %p120 = pneg %p114
      %p121 = scmp.eq.s32.totalorder %s16, 1
      %p122 = por %p120, %p121
      %p123 = scmp.ne.s32.totalorder %s115, %s118
      %p124 = scmp.eq.s32.totalorder %s16, 0
      %p125 = por %p123, %p124
      %p126 = scmp.ne.s32.totalorder %s115, %s118
      %p127 = scmp.eq.s32.totalorder %s21, 1
      %p128 = por %p126, %p127
      %p129 = scmp.ne.s32.totalorder %s118, %s119
      %p130 = scmp.eq.s32.totalorder %s21, 0
      %p131 = por %p129, %p130
      %p132 = scmp.ne.s32.totalorder %s118, %s119
      %p133 = scmp.eq.s32.totalorder %s22, 1
      %p134 = por %p132, %p133
      %p136 = scmp.ne.s32.totalorder %s119, %s135
      %p137 = scmp.eq.s32.totalorder %s22, 0
      %p138 = por %p136, %p137
      %p139 = scmp.le.s32.totalorder 1, %s16
      %p140 = scmp.lt.s32.totalorder %s16, 3
      %p141 = pnand %p139, %p140
      %p142 = pneg %p141
      // Predicated region
      $region9: #{tpu_custom_call.1} parent=5 // pred_check
        _
      $region10: #{tpu_custom_call.1} parent=5 // pred_check_branch
        %144 = sbr.rel (%p141) target = $region12
      $region11: #{tpu_custom_call.1} parent=5 // pred_region
        %s145 = ssub.s32 %s16, 1
        // Predicated region
        $region13: #{tpu_custom_call.1} parent=11 // pred_check
          %p146 = pneg %p63
        $region14: #{tpu_custom_call.1} parent=11 // pred_check_branch
          %148 = sbr.rel (%p146) target = $region16
        $region15: #{tpu_custom_call.1} parent=11 // pred_region
          _
        $region16: #{tpu_custom_call.1} parent=11 // pred_fallthru
          _
        // Predicated region
        $region17: #{tpu_custom_call.1} parent=11 // pred_check
          %p149 = pneg %p84
        $region18: #{tpu_custom_call.1} parent=11 // pred_check_branch
          %151 = sbr.rel (%p149) target = $region20
        $region19: #{tpu_custom_call.1} parent=11 // pred_region
          _
        $region20: #{tpu_custom_call.1} parent=11 // pred_fallthru
          _
        // Predicated region
        $region21: #{tpu_custom_call.1} parent=11 // pred_check
          %p152 = pneg %p105
        $region22: #{tpu_custom_call.1} parent=11 // pred_check_branch
          %154 = sbr.rel (%p152) target = $region24
        $region23: #{tpu_custom_call.1} parent=11 // pred_region
          _
        $region24: #{tpu_custom_call.1} parent=11 // pred_fallthru
          _
      $region12: #{tpu_custom_call.1} parent=5 // pred_fallthru
        _
      %p155 = scmp.lt.s32.totalorder %s16, 2
      // Predicated region
      $region25: #{tpu_custom_call.1} parent=5 // pred_check
        %p156 = pneg %p155
      $region26: #{tpu_custom_call.1} parent=5 // pred_check_branch
        %158 = sbr.rel (%p156) target = $region28
      $region27: #{tpu_custom_call.1} parent=5 // pred_region
        // Predicated region
        $region29: #{tpu_custom_call.1} parent=27 // pred_check
          %p159 = pneg %p36
        $region30: #{tpu_custom_call.1} parent=27 // pred_check_branch
          %161 = sbr.rel (%p159) target = $region32
        $region31: #{tpu_custom_call.1} parent=27 // pred_region
          %s162 = sand.u32 %s26, 1
          %s163 = scalar_lea.sflag [#allocation3], %s162
          %s164 = sand.u32 %s26, 1
          %s165 = smul.addr %s164, 32
          %s166 = scalar_lea.vmem [#allocation2], %s165
          %s168 = ssub.s32 512, 512
          %169 = vsyncadd %s163, %s168
          %s170 = smul.addr %s16, 4
          %s171 = smul.addr %s170, 128
          %s172 = scalar_lea.hbm %s0, %s171
          %s173 = sshll.u32 %s166, 4
          %s174 = int_to_ptr.vmem [resolvable:$true] %s173
          %179 = dma.hbm_to_vmem [thread:$0]  %s172, 512, %s174, %s163, 256, 256, 16
        $region32: #{tpu_custom_call.1} parent=27 // pred_fallthru
          _
      $region28: #{tpu_custom_call.1} parent=5 // pred_fallthru
        _
      %p180 = scmp.le.s32.totalorder 1, %s16
      %p181 = scmp.lt.s32.totalorder %s16, 3
      %p182 = pnand %p180, %p181
      %p183 = pneg %p182
      // Predicated region
      $region33: #{tpu_custom_call.1} parent=5 // pred_check
        _
      $region34: #{tpu_custom_call.1} parent=5 // pred_check_branch
        %185 = sbr.rel (%p182) target = $region36
      $region35: #{tpu_custom_call.1} parent=5 // pred_region
        %s186 = ssub.s32 %s16, 1
        %s187 = sand.u32 %s29, 1
        %s188 = scalar_lea.sflag [#allocation3], %s187
        %s189 = sand.u32 %s29, 1
        %s190 = smul.addr %s189, 32
        %s191 = scalar_lea.vmem [#allocation2], %s190
        // Predicated region
        $region37: #{tpu_custom_call.1} parent=35 // pred_check
          %p192 = pneg %p42
        $region38: #{tpu_custom_call.1} parent=35 // pred_check_branch
          %194 = sbr.rel (%p192) target = $region40
        $region39: #{tpu_custom_call.1} parent=35 // pred_region
          %195 = dma.done %s188, 512
        $region40: #{tpu_custom_call.1} parent=35 // pred_fallthru
          _
        %s196 = sand.u32 %s29, 1
        %s197 = scalar_lea.sflag [#allocation3], %s196
        %s198 = sand.u32 %s29, 1
        %s199 = smul.addr %s198, 32
        %s200 = scalar_lea.vmem [#allocation2], %s199
        %p201 = pneg %p42
        %p202 = pneg %p39
        %p203 = pneg %p63
        %p204 = pneg %p60
        %p205 = pneg %p84
        %p206 = pneg %p81
        %p207 = pneg %p105
        %p208 = pneg %p102
        %p209 = pneg %p131
        %p210 = pneg %p128
        %s211 = sand.u32 %s118, 1
        %s212 = scalar_lea.sflag [#allocation4], %s211
        %s213 = sand.u32 %s118, 1
        %s214 = smul.addr %s213, 32
        %s215 = scalar_lea.vmem [#allocation5], %s214
        %v216 = vld [vmem:[%s191] sm:$0xff]
        %v217 = vld [vmem:[%s191 + $0x8] sm:$0xff]
        %v218 = vld [vmem:[%s191 + $0x10] sm:$0xff]
        %v219 = vld [vmem:[%s191 + $0x18] sm:$0xff]
        %v220 = vadd.f32 %v216, %v217
        %221 = vadd.xlane.f32.xlu0 %v220
        %v222 = vpop.xlane.xlu0 %221
        %v223 = vadd.f32 %v218, %v219
        %224 = vadd.xlane.f32.xlu0 %v223
        %v225 = vpop.xlane.xlu0 %224
        %v226 = vld [vmem:[%s1] sm:$0xff]
        %v227 = vld [vmem:[%s1 + $0x8] sm:$0xff]
        %v228 = vld [vmem:[%s3] sm:$0x1]
        %v231 = vlaneseq
        %v232 = vand.u32 %v231, 127
        %v233 = vlaneseq
        %v234 = vshrl.u32 %v233, 7
        %v235 = vsub.s32 %v232, %v234
        %v236 = vrot.slane %v222, %v235
        %v237 = vadd.s32 %v232, 4294967288
        %v238 = vlaneseq
        %v239 = vshrl.u32 %v238, 7
        %v240 = vsub.s32 %v237, %v239
        %v241 = vrot.slane %v225, %v240
        %vm242 = vcmask 130112
        %v243 = vsel %vm242, %v241, %v236
        %vm244 = vcmask 130048
        %v245 = vsel %vm244, %v243, 0
        %247 = vmatprep.subr.mxu0 0.0
        %248 = vmatpush1.msra.mxu0 %v226
        %249 = vmatprep.subr.mxu0 0.0
        %250 = vmatpush1.msra.mxu0 %v227
        %251 = vmatprep.subr.mxu0 0.0
        %252 = vmatpush1.msra.mxu0 0.0
        %253 = vmatprep.subr.mxu0 0.0
        %254 = vmatpush1.msra.mxu0 0.0
        %255 = vmatprep.subr.mxu0 0.0
        %256 = vmatpush1.msra.mxu0 0.0
        %257 = vmatprep.subr.mxu0 0.0
        %258 = vmatpush1.msra.mxu0 0.0
        %259 = vmatprep.subr.mxu0 0.0
        %260 = vmatpush1.msra.mxu0 0.0
        %261 = vmatprep.subr.mxu0 0.0
        %262 = vmatpush1.msra.mxu0 0.0
        %263 = vmatprep.subr.mxu0 0.0
        %264 = vmatpush1.msra.mxu0 0.0
        %265 = vmatprep.subr.mxu0 0.0
        %266 = vmatpush1.msra.mxu0 0.0
        %267 = vmatprep.subr.mxu0 0.0
        %268 = vmatpush1.msra.mxu0 0.0
        %269 = vmatprep.subr.mxu0 0.0
        %270 = vmatpush1.msra.mxu0 0.0
        %271 = vmatprep.subr.mxu0 0.0
        %272 = vmatpush1.msra.mxu0 0.0
        %273 = vmatprep.subr.mxu0 0.0
        %274 = vmatpush1.msra.mxu0 0.0
        %275 = vmatprep.subr.mxu0 0.0
        %276 = vmatpush1.msra.mxu0 0.0
        %277 = vmatprep.subr.mxu0 0.0
        %278 = vmatpush1.msra.mxu0 0.0
        %279 = vmatprep.subr.mxu0 0.0
        %280 = vmatpush1.msra.mxu0 0.0
        %281 = vmatprep.subr.mxu0 0.0
        %282 = vmatpush1.msra.mxu0 0.0
        %283 = vmatprep.subr.mxu0 0.0
        %284 = vmatpush1.msra.mxu0 0.0
        %285 = vmatprep.subr.mxu0 0.0
        %286 = vmatpush1.msra.mxu0 0.0
        %287 = vmatprep.subr.mxu0 0.0
        %288 = vmatpush1.msra.mxu0 0.0
        %289 = vmatprep.subr.mxu0 0.0
        %290 = vmatpush1.msra.mxu0 0.0
        %291 = vmatprep.subr.mxu0 0.0
        %292 = vmatpush1.msra.mxu0 0.0
        %293 = vmatprep.subr.mxu0 0.0
        %294 = vmatpush1.msra.mxu0 0.0
        %295 = vmatprep.subr.mxu0 0.0
        %296 = vmatpush1.msra.mxu0 0.0
        %297 = vmatprep.subr.mxu0 0.0
        %298 = vmatpush1.msra.mxu0 0.0
        %299 = vmatprep.subr.mxu0 0.0
        %300 = vmatpush1.msra.mxu0 0.0
        %301 = vmatprep.subr.mxu0 0.0
        %302 = vmatpush1.msra.mxu0 0.0
        %303 = vmatprep.subr.mxu0 0.0
        %304 = vmatpush1.msra.mxu0 0.0
        %305 = vmatprep.subr.mxu0 0.0
        %306 = vmatpush1.msra.mxu0 0.0
        %307 = vmatprep.subr.mxu0 0.0
        %308 = vmatpush1.msra.mxu0 0.0
        %309 = vmatprep.subr.mxu0 0.0
        %310 = vmatpush1.msra.mxu0 0.0
        %311 = vmatprep.mubr.f32.mxu0 0.0
        %312 = vmatmul.mubr.f32.gmra.mrb[0].mxu0 %v245
        %v313 = vpop.f32.mrb[0].mxu0
        %v314 = vadd.f32 %v228, %v313
        %v315 = vpop.f32.mrb[0].mxu0
        %316 = vdwg.mxu0
        %v317 = vmax.f32 %v314, 0.0
        %v318 = vld [vmem:[%s2] sm:$0xf]
        %vm319 = vcmask 31744
        %v321 = vsel %vm319, %v317, 0
        %vm323 = vcmask 1043456
        %v325 = vsel %vm323, %v318, 0
        %327 = vmatprep.subr.mxu0 0.0
        %328 = vmatpush1.msra.mxu0 %v325
        %329 = vmatprep.subr.mxu0 0.0
        %330 = vmatpush1.msra.mxu0 0.0
        %331 = vmatprep.subr.mxu0 0.0
        %332 = vmatpush1.msra.mxu0 0.0
        %333 = vmatprep.subr.mxu0 0.0
        %334 = vmatpush1.msra.mxu0 0.0
        %335 = vmatprep.subr.mxu0 0.0
        %336 = vmatpush1.msra.mxu0 0.0
        %337 = vmatprep.subr.mxu0 0.0
        %338 = vmatpush1.msra.mxu0 0.0
        %339 = vmatprep.subr.mxu0 0.0
        %340 = vmatpush1.msra.mxu0 0.0
        %341 = vmatprep.subr.mxu0 0.0
        %342 = vmatpush1.msra.mxu0 0.0
        %343 = vmatprep.subr.mxu0 0.0
        %344 = vmatpush1.msra.mxu0 0.0
        %345 = vmatprep.subr.mxu0 0.0
        %346 = vmatpush1.msra.mxu0 0.0
        %347 = vmatprep.subr.mxu0 0.0
        %348 = vmatpush1.msra.mxu0 0.0
        %349 = vmatprep.subr.mxu0 0.0
        %350 = vmatpush1.msra.mxu0 0.0
        %351 = vmatprep.subr.mxu0 0.0
        %352 = vmatpush1.msra.mxu0 0.0
        %353 = vmatprep.subr.mxu0 0.0
        %354 = vmatpush1.msra.mxu0 0.0
        %355 = vmatprep.subr.mxu0 0.0
        %356 = vmatpush1.msra.mxu0 0.0
        %357 = vmatprep.subr.mxu0 0.0
        %358 = vmatpush1.msra.mxu0 0.0
        %359 = vmatprep.subr.mxu0 0.0
        %360 = vmatpush1.msra.mxu0 0.0
        %361 = vmatprep.subr.mxu0 0.0
        %362 = vmatpush1.msra.mxu0 0.0
        %363 = vmatprep.subr.mxu0 0.0
        %364 = vmatpush1.msra.mxu0 0.0
        %365 = vmatprep.subr.mxu0 0.0
        %366 = vmatpush1.msra.mxu0 0.0
        %367 = vmatprep.subr.mxu0 0.0
        %368 = vmatpush1.msra.mxu0 0.0
        %369 = vmatprep.subr.mxu0 0.0
        %370 = vmatpush1.msra.mxu0 0.0
        %371 = vmatprep.subr.mxu0 0.0
        %372 = vmatpush1.msra.mxu0 0.0
        %373 = vmatprep.subr.mxu0 0.0
        %374 = vmatpush1.msra.mxu0 0.0
        %375 = vmatprep.subr.mxu0 0.0
        %376 = vmatpush1.msra.mxu0 0.0
        %377 = vmatprep.subr.mxu0 0.0
        %378 = vmatpush1.msra.mxu0 0.0
        %379 = vmatprep.subr.mxu0 0.0
        %380 = vmatpush1.msra.mxu0 0.0
        %381 = vmatprep.subr.mxu0 0.0
        %382 = vmatpush1.msra.mxu0 0.0
        %383 = vmatprep.subr.mxu0 0.0
        %384 = vmatpush1.msra.mxu0 0.0
        %385 = vmatprep.subr.mxu0 0.0
        %386 = vmatpush1.msra.mxu0 0.0
        %387 = vmatprep.subr.mxu0 0.0
        %388 = vmatpush1.msra.mxu0 0.0
        %389 = vmatprep.subr.mxu0 0.0
        %390 = vmatpush1.msra.mxu0 0.0
        %391 = vmatprep.mubr.f32.mxu0 0.0
        %392 = vmatmul.mubr.f32.gmra.mrb[0].mxu0 %v321
        %v393 = vpop.f32.mrb[0].mxu0
        %v394 = vadd.f32 3.0, %v393
        %v395 = vpop.f32.mrb[0].mxu0
        %396 = vdwg.mxu0
        %v397 = vmax.f32 %v394, 0.0
        %v398 = vmin.f32 %v397, 6.0
        %v399 = vmul.f32 %v398, 0.16666667
        %v400 = vlaneseq
        %v401 = vshrl.u32 %v400, 7
        %v402 = vsub.s32 0, %v401
        %v403 = vrot.slane %v399, %v402
        %405 = vbcast.lane.b32.xlu0 %v403, 256
        %v406 = vpop.permute.xlu0 %405
        %s408 = sor.u32 256, 8
        %409 = vbcast.lane.b32.xlu0 %v403, %s408
        %v410 = vpop.permute.xlu0 %409
        %v411 = vmul.f32 %v216, %v406
        %v412 = vmul.f32 %v217, %v406
        %v413 = vmul.f32 %v218, %v410
        %v414 = vmul.f32 %v219, %v410
        %415 = vst [vmem:[%s215] sm:$0xff] %v411
        %416 = vst [vmem:[%s215 + $0x8] sm:$0xff] %v412
        %417 = vst [vmem:[%s215 + $0x10] sm:$0xff] %v413
        %418 = vst [vmem:[%s215 + $0x18] sm:$0xff] %v414
        %s419 = sand.u32 %s118, 1
        %s420 = scalar_lea.sflag [#allocation4], %s419
        %s421 = sand.u32 %s118, 1
        %s422 = smul.addr %s421, 32
        %s423 = scalar_lea.vmem [#allocation5], %s422
        // Predicated region
        $region41: #{tpu_custom_call.1} parent=35 // pred_check
          %p424 = pneg %p128
        $region42: #{tpu_custom_call.1} parent=35 // pred_check_branch
          %426 = sbr.rel (%p424) target = $region44
        $region43: #{tpu_custom_call.1} parent=35 // pred_region
          %s428 = ssub.s32 512, 512
          %429 = vsyncadd %s420, %s428
          %s430 = smul.addr %s21, 4
          %s431 = smul.addr %s430, 128
          %s432 = scalar_lea.hbm %s4, %s431
          %s433 = sshll.u32 %s423, 4
          %s434 = int_to_ptr.vmem [resolvable:$true] %s433
          %439 = dma.vmem_to_hbm [thread:$0]  %s434, 512, %s432, %s420, 256, 256, 16
        $region44: #{tpu_custom_call.1} parent=35 // pred_fallthru
          _
      $region36: #{tpu_custom_call.1} parent=5 // pred_fallthru
        _
      %p440 = scmp.le.s32.totalorder 2, %s16
      // Predicated region
      $region45: #{tpu_custom_call.1} parent=5 // pred_check
        %p441 = pneg %p440
      $region46: #{tpu_custom_call.1} parent=5 // pred_check_branch
        %443 = sbr.rel (%p441) target = $region48
      $region47: #{tpu_custom_call.1} parent=5 // pred_region
        %s444 = ssub.s32 %s16, 2
        // Predicated region
        $region49: #{tpu_custom_call.1} parent=47 // pred_check
          %p445 = pneg %p134
        $region50: #{tpu_custom_call.1} parent=47 // pred_check_branch
          %447 = sbr.rel (%p445) target = $region52
        $region51: #{tpu_custom_call.1} parent=47 // pred_region
          %s448 = sand.u32 %s119, 1
          %s449 = scalar_lea.sflag [#allocation4], %s448
          %s450 = sand.u32 %s119, 1
          %s451 = smul.addr %s450, 32
          %s452 = scalar_lea.vmem [#allocation5], %s451
          %453 = dma.done %s449, 512
        $region52: #{tpu_custom_call.1} parent=47 // pred_fallthru
          _
      $region48: #{tpu_custom_call.1} parent=5 // pred_fallthru
        _
    $region6: #{tpu_custom_call.1} parent=1 // loop_footer
      %s20 = sadd.s32 1, %s16
    $region7: #{tpu_custom_call.1} parent=1 // loop_footer_branch
      %15 = sbr.rel target = $region3
    $region8: #{tpu_custom_call.1} parent=1 // loop_exit
      _
    %454 = vsyncpa [#allocation3], 1
    %s455 = scalar_lea.sflag [#allocation3], 1
    %456 = vsyncpa %s455, 1
    %457 = vsyncpa [#allocation4], 1
    %s458 = scalar_lea.sflag [#allocation4], 1
    %459 = vsyncpa %s458, 1

</llo_original>
